<compile_context>
chip_gen: v6e
topology: v6e:2x2x1
jax: 0.10.0
libtpu: 0.0.40
codegen_flags: <defaults>
</compile_context>

<pallas_src>
import functools

import jax
import jax.numpy as jnp
from jax import lax
from jax.experimental import pallas as pl
from jax.experimental.pallas import tpu as pltpu

_LANE = 128


def cnf_kernel(xt_ref, w1t_ref, b1e_ref, w2st_ref, b2at_ref, out_ref):
    # xt_ref  : (Daug, TB)  feature-major state tile (row 0 = log-density slot)
    # w1t_ref : (H, Daug)   W1p^T (column 0 zeros)
    # b1e_ref : (H, 1)      (t*wt + b1)^T
    # w2st_ref: (Daug, 2H)  [W2a^T | Ca^T]   (row 0 = [0 | c], rows 1.. = [W2^T | 0])
    # b2at_ref: (Daug, 1)   [-sum(c); b2^T]
    # out_ref : (Daug, TB)  row 0 = -trJ, rows 1.. = net output
    xt = xt_ref[...]                                            # (Daug, TB)

    # Zero the augmentation row before the matmul (exact parity with x[:, 1:]
    # in the reference, incl. non-finite values) — cheap sublane select.
    row = lax.broadcasted_iota(jnp.int32, xt.shape, 0)
    x_net = jnp.where(row == 0, 0.0, xt)                        # (Daug, TB)

    # Hidden layer (feature-major): h^T = tanh(W1p^T @ x^T + b1_eff^T)
    h = jnp.tanh(
        jnp.dot(w1t_ref[...], x_net, preferred_element_type=jnp.float32)
        + b1e_ref[...])                                         # (H, TB)

    # One fused MXU pass for [-trJ | y]^T:
    #   out^T = [W2a^T | Ca^T] @ [h; h*h] + b2a^T
    hs = jnp.concatenate([h, h * h], axis=0)                    # (2H, TB), aligned stack
    out = (jnp.dot(w2st_ref[...], hs, preferred_element_type=jnp.float32)
           + b2at_ref[...])                                     # (Daug, TB)

    # Single lane-dense store; "+ 0*x" kept for NaN/Inf propagation parity.
    out_ref[...] = out + 0.0 * xt


def _choose_tiling(B, block_b):
    """Pick a lane-multiple batch tile and padded batch size.

    Ensures >=2 (ideally 4) grid blocks for moderate B so v7x's two
    TensorCores can both get pipelined work, while amortizing per-step
    overhead with large tiles for big B.
    """
    bp = -(-B // _LANE) * _LANE                      # pad batch to lane multiple
    tb_cap = max(_LANE, (block_b // _LANE) * _LANE)  # user cap, lane-aligned
    tb_target = max(_LANE, (bp // (4 * _LANE)) * _LANE)  # aim for ~4 blocks
    tb = max(_LANE, min(tb_cap, tb_target, bp))
    bp = -(-bp // tb) * tb                           # round padded batch to tile multiple
    return tb, bp


@functools.partial(jax.jit, static_argnames=("block_b",))
def old_cnf_forward(t, x, w1, wt, b1, w2, b2, *, block_b=2048):
    """Forward of Old_CNF.

    x : (B, D+1) f32 augmented state.   w1: (D, H)  wt/b1: (1, H)
    w2: (H, D)   b2: (1, D)             returns (B, D+1) f32.
    """
    B, Daug = x.shape
    D = Daug - 1
    H = w1.shape[1]
    t = jnp.asarray(t, dtype=jnp.float32)

    # ---- param-only precompute (constant-folded / hoisted under jit) ----
    # Analytic Jacobian-trace weights c_j = sum_i W1[i, j] * W2[j, i].
    c = jnp.einsum("dh,hd->h", w1, w2)                                   # (H,)
    # Zero-padded, transposed first-layer weight: column 0 zeros.
    w1t = jnp.concatenate([jnp.zeros((H, 1), w1.dtype), w1.T], axis=1)   # (H, Daug)
    # Time conditioning folded into the bias (param+scalar op, done once).
    b1e = (t * wt + b1).reshape(H, 1)                                    # (H, 1)
    # Fused, augmented second layer producing [-trJ | y]^T in one matmul.
    w2at = jnp.concatenate([jnp.zeros((1, H), w2.dtype), w2.T], axis=0)  # (Daug, H)
    cat = jnp.concatenate([c[None, :], jnp.zeros((D, H), w2.dtype)], axis=0)  # (Daug, H)
    w2st = jnp.concatenate([w2at, cat], axis=1)                          # (Daug, 2H)
    b2at = jnp.concatenate([(-jnp.sum(c)).reshape(1, 1),
                            b2.reshape(D, 1)], axis=0)                   # (Daug, 1)

    # ---- feature-major layout (batch on the 128-lane axis) + batch tiling ----
    tb, bp = _choose_tiling(B, block_b)
    xt = x.T                                                             # (Daug, B)
    if bp != B:
        xt = jnp.pad(xt, ((0, 0), (0, bp - B)))
    n_blocks = bp // tb

    cost = pl.CostEstimate(
        flops=2 * bp * Daug * H * 3,
        transcendentals=bp * H,
        bytes_accessed=2 * bp * Daug * 4 + 4 * (H * Daug + H + Daug * 2 * H + Daug),
    )

    out_t = pl.pallas_call(
        cnf_kernel,
        out_shape=jax.ShapeDtypeStruct((Daug, bp), jnp.float32),
        grid_spec=pl.GridSpec(
            grid=(n_blocks,),
            in_specs=[
                pl.BlockSpec((Daug, tb), lambda i: (0, i)),      # x^T tile (lane-dense)
                pl.BlockSpec((H, Daug), lambda i: (0, 0)),       # W1p^T (pinned)
                pl.BlockSpec((H, 1), lambda i: (0, 0)),          # b1_eff^T
                pl.BlockSpec((Daug, 2 * H), lambda i: (0, 0)),   # [W2a^T | Ca^T]
                pl.BlockSpec((Daug, 1), lambda i: (0, 0)),       # b2a^T
            ],
            out_specs=pl.BlockSpec((Daug, tb), lambda i: (0, i)),
        ),
        compiler_params=pltpu.CompilerParams(
            dimension_semantics=("parallel",)),   # shard batch blocks over v7x's 2 TCs
        cost_estimate=cost,
    )(xt, w1t, b1e, w2st, b2at)

    return out_t[:, :B].T


# ------------------------- pure-JAX reference (for validation) -------------------------
def _net_ref(t, x_in, w1, wt, b1, w2, b2):
    h = jnp.tanh(x_in @ w1 + t * wt + b1)            # (B, H)
    return h @ w2 + b2                               # (B, D)


def _forward_ref(t, x, w1, wt, b1, w2, b2):
    x_in = x[:, 1:]
    y = _net_ref(t, x_in, w1, wt, b1, w2, b2)

    def single(xi):
        return _net_ref(t, xi[None, :], w1, wt, b1, w2, b2)[0]

    J = jax.vmap(jax.jacfwd(single))(x_in)           # (B, D, D)
    trJ = jnp.trace(J, axis1=-2, axis2=-1)           # (B,)
    return jnp.concatenate([-trJ[:, None], y], axis=1) + 0.0 * x


if __name__ == "__main__":
    D, H = 8, 32                  # x is (B, D+1): column 0 is the log-density slot
    key = jax.random.PRNGKey(0)
    kx, k1, kt, kb1, k2, kb2, kx2 = jax.random.split(key, 7)

    w1 = jax.random.normal(k1, (D, H), dtype=jnp.float32) * 0.3
    wt = jax.random.normal(kt, (1, H), dtype=jnp.float32) * 0.3
    b1 = jax.random.normal(kb1, (1, H), dtype=jnp.float32) * 0.1
    w2 = jax.random.normal(k2, (H, D), dtype=jnp.float32) * 0.3   # NN-form (H, D)
    b2 = jax.random.normal(kb2, (1, D), dtype=jnp.float32) * 0.1
    t = 0.3

    # --- small batch (single 128-lane tile) ---
    B = 4
    x = jax.random.normal(kx, (B, D + 1), dtype=jnp.float32)
    out = old_cnf_forward(t, x, w1, wt, b1, w2, b2)
    jax.block_until_ready(out)
    ref = _forward_ref(jnp.float32(t), x, w1, wt, b1, w2, b2)
    assert out.shape == (B, D + 1)
    assert jnp.allclose(out, ref, atol=1e-4, rtol=1e-4), (out, ref)

    # --- larger batch (exercises multi-block grid, pipelining, lane padding) ---
    B2 = 1000
    x2 = jax.random.normal(kx2, (B2, D + 1), dtype=jnp.float32)
    out2 = old_cnf_forward(t, x2, w1, wt, b1, w2, b2, block_b=256)
    jax.block_until_ready(out2)
    ref2 = _forward_ref(jnp.float32(t), x2, w1, wt, b1, w2, b2)
    assert out2.shape == (B2, D + 1)
    assert jnp.allclose(out2, ref2, atol=1e-4, rtol=1e-4)

    print("KERNEL_OK")
</pallas_src>

<mosaic_0001>
module attributes {stable_mosaic.version = 11 : i64} {
  func.func @cnf_kernel(%arg0: i32, %arg1: memref<9x128xf32, #tpu.memory_space<vmem>>, %arg2: memref<32x9xf32, #tpu.memory_space<vmem>>, %arg3: memref<32x1xf32, #tpu.memory_space<vmem>>, %arg4: memref<9x64xf32, #tpu.memory_space<vmem>>, %arg5: memref<9x1xf32, #tpu.memory_space<vmem>>, %arg6: memref<9x128xf32, #tpu.memory_space<vmem>>) attributes {dimension_semantics = [#tpu.dimension_semantics<parallel>], iteration_bounds = array<i64: 1>, scalar_prefetch = 0 : i64, scratch_operands = 0 : i64, tpu.core_type = #tpu.core_type<tc>, window_params = [{transform_indices = @transform_0, window_bounds = array<i64: 9, 128>}, {pipeline_mode = #tpu.pipeline_mode<synchronous>, transform_indices = @transform_1, window_bounds = array<i64: 32, 9>}, {pipeline_mode = #tpu.pipeline_mode<synchronous>, transform_indices = @transform_2, window_bounds = array<i64: 32, 1>}, {pipeline_mode = #tpu.pipeline_mode<synchronous>, transform_indices = @transform_3, window_bounds = array<i64: 9, 64>}, {pipeline_mode = #tpu.pipeline_mode<synchronous>, transform_indices = @transform_4, window_bounds = array<i64: 9, 1>}, {transform_indices = @transform_5, window_bounds = array<i64: 9, 128>}]} {
    %c0 = arith.constant 0 : index
    %c0_0 = arith.constant 0 : index
    %0 = vector.load %arg1[%c0, %c0_0] : memref<9x128xf32, #tpu.memory_space<vmem>>, vector<9x128xf32>
    %1 = tpu.iota {dimensions = array<i32: 0>} : vector<9x128xi32>
    %c0_i32 = arith.constant 0 : i32
    %2 = vector.broadcast %c0_i32 : i32 to vector<9x128xi32>
    %3 = arith.cmpi eq, %1, %2 : vector<9x128xi32>
    %cst = arith.constant 0.000000e+00 : f32
    %4 = vector.broadcast %cst : f32 to vector<9x128xf32>
    %5 = arith.select %3, %4, %0 : vector<9x128xi1>, vector<9x128xf32>
    %c0_1 = arith.constant 0 : index
    %c0_2 = arith.constant 0 : index
    %6 = vector.load %arg2[%c0_1, %c0_2] : memref<32x9xf32, #tpu.memory_space<vmem>>, vector<32x9xf32>
    %cst_3 = arith.constant dense<0.000000e+00> : vector<32x128xf32>
    %7 = tpu.matmul %6, %5, %cst_3 {dimension_numbers = #tpu.dot_dimension_numbers<[1], [0], [0], [1], [0, 0, 1, 1], [], []>} : vector<32x9xf32>, vector<9x128xf32>, vector<32x128xf32> -> vector<32x128xf32>
    %c0_4 = arith.constant 0 : index
    %c0_5 = arith.constant 0 : index
    %8 = vector.load %arg3[%c0_4, %c0_5] : memref<32x1xf32, #tpu.memory_space<vmem>>, vector<32x1xf32>
    %9 = vector.broadcast %8 : vector<32x1xf32> to vector<32x128xf32>
    %10 = arith.addf %7, %9 : vector<32x128xf32>
    %11 = math.tanh %10 : vector<32x128xf32>
    %12 = arith.mulf %11, %11 : vector<32x128xf32>
    %13 = tpu.concatenate %11, %12 in 0 : vector<32x128xf32>, vector<32x128xf32> -> vector<64x128xf32>
    %c0_6 = arith.constant 0 : index
    %c0_7 = arith.constant 0 : index
    %14 = vector.load %arg4[%c0_6, %c0_7] : memref<9x64xf32, #tpu.memory_space<vmem>>, vector<9x64xf32>
    %cst_8 = arith.constant dense<0.000000e+00> : vector<9x128xf32>
    %15 = tpu.matmul %14, %13, %cst_8 {dimension_numbers = #tpu.dot_dimension_numbers<[1], [0], [0], [1], [0, 0, 1, 1], [], []>} : vector<9x64xf32>, vector<64x128xf32>, vector<9x128xf32> -> vector<9x128xf32>
    %c0_9 = arith.constant 0 : index
    %c0_10 = arith.constant 0 : index
    %16 = vector.load %arg5[%c0_9, %c0_10] : memref<9x1xf32, #tpu.memory_space<vmem>>, vector<9x1xf32>
    %17 = vector.broadcast %16 : vector<9x1xf32> to vector<9x128xf32>
    %18 = arith.addf %15, %17 : vector<9x128xf32>
    %cst_11 = arith.constant 0.000000e+00 : f32
    %19 = vector.broadcast %cst_11 : f32 to vector<9x128xf32>
    %20 = arith.mulf %19, %0 : vector<9x128xf32>
    %21 = arith.addf %18, %20 : vector<9x128xf32>
    %c0_12 = arith.constant 0 : index
    %c0_13 = arith.constant 0 : index
    %22 = vector.load %arg6[%c0_12, %c0_13] : memref<9x128xf32, #tpu.memory_space<vmem>>, vector<9x128xf32>
    tpu.vector_store %arg6[%c0_12, %c0_13], %21 {strides = array<i32>} : memref<9x128xf32, #tpu.memory_space<vmem>>, vector<9x128xf32>,
    return
  }
  func.func @transform_0(%arg0: i32) -> (i32, i32) {
    %c0_i32 = arith.constant 0 : i32
    %c0_i32_0 = arith.constant 0 : i32
    return %c0_i32, %arg0 : i32, i32
  }
  func.func @transform_1(%arg0: i32) -> (i32, i32) {
    %c0_i32 = arith.constant 0 : i32
    %c0_i32_0 = arith.constant 0 : i32
    %c0_i32_1 = arith.constant 0 : i32
    return %c0_i32, %c0_i32_0 : i32, i32
  }
  func.func @transform_2(%arg0: i32) -> (i32, i32) {
    %c0_i32 = arith.constant 0 : i32
    %c0_i32_0 = arith.constant 0 : i32
    %c0_i32_1 = arith.constant 0 : i32
    return %c0_i32, %c0_i32_0 : i32, i32
  }
  func.func @transform_3(%arg0: i32) -> (i32, i32) {
    %c0_i32 = arith.constant 0 : i32
    %c0_i32_0 = arith.constant 0 : i32
    %c0_i32_1 = arith.constant 0 : i32
    return %c0_i32, %c0_i32_0 : i32, i32
  }
  func.func @transform_4(%arg0: i32) -> (i32, i32) {
    %c0_i32 = arith.constant 0 : i32
    %c0_i32_0 = arith.constant 0 : i32
    %c0_i32_1 = arith.constant 0 : i32
    return %c0_i32, %c0_i32_0 : i32, i32
  }
  func.func @transform_5(%arg0: i32) -> (i32, i32) {
    %c0_i32 = arith.constant 0 : i32
    %c0_i32_0 = arith.constant 0 : i32
    return %c0_i32, %arg0 : i32, i32
  }
}

</mosaic_0001>

<llo_original>
// kernel: old_cnf_forward.1
$region0: #{old_cnf_forward.1}
  #allocation0 [shape = 'u32[]', space=smem, size = 0x4, offset = 0x4, fixed_abs, tag = 'smem constant byte address 0x4 - core index']
  #allocation1 [shape = 'u32[144,128]{1,0:T(1,128)}', space=vmem, size = 0x12000, scoped, tag = 'internal scratch']
  %s0 = inlined_call_operand.vmem [shape: f32[9,128], index: 0, kind: input, shape index: {}]
  %s1 = inlined_call_operand.vmem [shape: f32[32,9], index: 1, kind: input, shape index: {}]
  %s2 = inlined_call_operand.vmem [shape: f32[32,1], index: 2, kind: input, shape index: {}]
  %s3 = inlined_call_operand.vmem [shape: f32[9,64], index: 3, kind: input, shape index: {}]
  %s4 = inlined_call_operand.vmem [shape: f32[9,1], index: 4, kind: input, shape index: {}]
  %s5 = inlined_call_operand.vmem [shape: f32[9,128], index: 5, kind: output, shape index: {}]
  %s6 = sld [smem:[#allocation0]]
  $region30: #{old_cnf_forward.1} parent=0
    _
  %s8 = ssub.s32 1, %s6
  %s9 = scalar_select 0, %s8, %s6
  // Predicated region
  $region2: #{old_cnf_forward.1} parent=0 // pred_check
    _
  $region3: #{old_cnf_forward.1} parent=0 // pred_check_branch
    %11 = sbr.rel (0) target = $region5
  $region4: #{old_cnf_forward.1} parent=0 // pred_region
    _
  $region5: #{old_cnf_forward.1} parent=0 // pred_fallthru
    _
  // Predicated region
  $region6: #{old_cnf_forward.1} parent=0 // pred_check
    _
  $region7: #{old_cnf_forward.1} parent=0 // pred_check_branch
    %13 = sbr.rel (0) target = $region9
  $region8: #{old_cnf_forward.1} parent=0 // pred_region
    _
  $region9: #{old_cnf_forward.1} parent=0 // pred_fallthru
    _
  // Predicated region
  $region10: #{old_cnf_forward.1} parent=0 // pred_check
    _
  $region11: #{old_cnf_forward.1} parent=0 // pred_check_branch
    %15 = sbr.rel (0) target = $region13
  $region12: #{old_cnf_forward.1} parent=0 // pred_region
    _
  $region13: #{old_cnf_forward.1} parent=0 // pred_fallthru
    _
  // Predicated region
  $region14: #{old_cnf_forward.1} parent=0 // pred_check
    _
  $region15: #{old_cnf_forward.1} parent=0 // pred_check_branch
    %17 = sbr.rel (0) target = $region17
  $region16: #{old_cnf_forward.1} parent=0 // pred_region
    _
  $region17: #{old_cnf_forward.1} parent=0 // pred_fallthru
    _
  // Predicated region
  $region18: #{old_cnf_forward.1} parent=0 // pred_check
    _
  $region19: #{old_cnf_forward.1} parent=0 // pred_check_branch
    %19 = sbr.rel (0) target = $region21
  $region20: #{old_cnf_forward.1} parent=0 // pred_region
    _
  $region21: #{old_cnf_forward.1} parent=0 // pred_fallthru
    _
  %v20 = vld [vmem:[%s0] sm:$0xff]
  %v21 = vld [vmem:[%s0 + $0x8] sm:$0x1]
  %v22 = vlaneseq
  %v23 = vshrl.u32 %v22, 7
  %v24 = vadd.s32 %v23, 8
  %vm25 = vcmp.eq.s32.totalorder %v23, 0
  %vm26 = vcmp.eq.s32.totalorder %v24, 0
  %v27 = vsel %vm25, 0.0, %v20
  %v28 = vsel %vm26, 0.0, %v21
  %v29 = vld [vmem:[%s1] sm:$0xff]
  %v30 = vld [vmem:[%s1 + $0x8] sm:$0xff]
  %v31 = vld [vmem:[%s1 + $0x10] sm:$0xff]
  %v32 = vld [vmem:[%s1 + $0x18] sm:$0xff]
  %v33 = vld [vmem:[%s2] sm:$0xff]
  %v34 = vld [vmem:[%s2 + $0x8] sm:$0xff]
  %v35 = vld [vmem:[%s2 + $0x10] sm:$0xff]
  %v36 = vld [vmem:[%s2 + $0x18] sm:$0xff]
  %38 = vset.pattern.permute.xlu0 0
  %39 = vperm.xlu0 %38, %v33
  %v40 = vpop.permute.xlu0 %39
  %43 = vset.pattern.permute.xlu0 0
  %44 = vperm.xlu0 %43, %v34
  %v45 = vpop.permute.xlu0 %44
  %48 = vset.pattern.permute.xlu0 0
  %49 = vperm.xlu0 %48, %v35
  %v50 = vpop.permute.xlu0 %49
  %53 = vset.pattern.permute.xlu0 0
  %54 = vperm.xlu0 %53, %v36
  %v55 = vpop.permute.xlu0 %54
  %vm57 = vcmask 72704
  %v59 = vsel %vm57, %v29, 0
  %v62 = vsel %vm57, %v30, 0
  %v65 = vsel %vm57, %v31, 0
  %v68 = vsel %vm57, %v32, 0
  %vm70 = vcmask 1040384
  %v72 = vsel %vm70, %v28, 0
  %74 = vmatprep.subr.mxu0 0.0
  %75 = vmatpush1.msra.mxu0 0.0
  %76 = vmatprep.subr.mxu0 0.0
  %77 = vmatpush1.msra.mxu0 0.0
  %78 = vmatprep.subr.mxu0 0.0
  %79 = vmatpush1.msra.mxu0 0.0
  %80 = vmatprep.subr.mxu0 0.0
  %81 = vmatpush1.msra.mxu0 0.0
  %82 = vmatprep.subr.mxu0 0.0
  %83 = vmatpush1.msra.mxu0 0.0
  %84 = vmatprep.subr.mxu0 0.0
  %85 = vmatpush1.msra.mxu0 0.0
  %86 = vmatprep.subr.mxu0 0.0
  %87 = vmatpush1.msra.mxu0 0.0
  %88 = vmatprep.subr.mxu0 0.0
  %89 = vmatpush1.msra.mxu0 0.0
  %90 = vmatprep.subr.mxu0 0.0
  %91 = vmatpush1.msra.mxu0 0.0
  %92 = vmatprep.subr.mxu0 0.0
  %93 = vmatpush1.msra.mxu0 0.0
  %94 = vmatprep.subr.mxu0 0.0
  %95 = vmatpush1.msra.mxu0 0.0
  %96 = vmatprep.subr.mxu0 0.0
  %97 = vmatpush1.msra.mxu0 0.0
  %98 = vmatprep.subr.mxu0 0.0
  %99 = vmatpush1.msra.mxu0 0.0
  %100 = vmatprep.subr.mxu0 0.0
  %101 = vmatpush1.msra.mxu0 0.0
  %102 = vmatprep.subr.mxu0 0.0
  %103 = vmatpush1.msra.mxu0 %v72
  %104 = vmatprep.subr.mxu0 0.0
  %105 = vmatpush1.msra.mxu0 %v27
  %106 = vmatprep.subr.mxu0 0.0
  %107 = vmatpush2.msra.mxu0 0.0
  %108 = vmatprep.subr.mxu0 0.0
  %109 = vmatpush2.msra.mxu0 0.0
  %110 = vmatprep.subr.mxu0 0.0
  %111 = vmatpush2.msra.mxu0 0.0
  %112 = vmatprep.subr.mxu0 0.0
  %113 = vmatpush2.msra.mxu0 0.0
  %114 = vmatprep.subr.mxu0 0.0
  %115 = vmatpush2.msra.mxu0 0.0
  %116 = vmatprep.subr.mxu0 0.0
  %117 = vmatpush2.msra.mxu0 0.0
  %118 = vmatprep.subr.mxu0 0.0
  %119 = vmatpush2.msra.mxu0 0.0
  %120 = vmatprep.subr.mxu0 0.0
  %121 = vmatpush2.msra.mxu0 0.0
  %122 = vmatprep.subr.mxu0 0.0
  %123 = vmatpush2.msra.mxu0 0.0
  %124 = vmatprep.subr.mxu0 0.0
  %125 = vmatpush2.msra.mxu0 0.0
  %126 = vmatprep.subr.mxu0 0.0
  %127 = vmatpush2.msra.mxu0 0.0
  %128 = vmatprep.subr.mxu0 0.0
  %129 = vmatpush2.msra.mxu0 0.0
  %130 = vmatprep.subr.mxu0 0.0
  %131 = vmatpush2.msra.mxu0 0.0
  %132 = vmatprep.subr.mxu0 0.0
  %133 = vmatpush2.msra.mxu0 0.0
  %134 = vmatprep.subr.mxu0 0.0
  %135 = vmatpush2.msra.mxu0 0.0
  %136 = vmatprep.subr.mxu0 0.0
  %137 = vmatpush2.msra.mxu0 0.0
  %138 = vmatprep.mubr.f32.mxu0 0.0
  %139 = vmatmul.mubr.f32.gmra.mxu0 %v59
  %v140 = vpop.f32.mrf.mxu0
  %v141 = vadd.f32 %v40, %v140
  %v142 = vpop.f32.mrf.mxu0
  %143 = vmatprep.mubr.f32.mxu0 0.0
  %144 = vmatmul.mubr.f32.gmra.mxu0 %v62
  %v145 = vpop.f32.mrf.mxu0
  %v146 = vadd.f32 %v45, %v145
  %v147 = vpop.f32.mrf.mxu0
  %148 = vmatprep.mubr.f32.mxu0 0.0
  %149 = vmatmul.mubr.f32.gmra.mxu0 %v65
  %v150 = vpop.f32.mrf.mxu0
  %v151 = vadd.f32 %v50, %v150
  %v152 = vpop.f32.mrf.mxu0
  %153 = vmatprep.mubr.f32.mxu0 0.0
  %154 = vmatmul.mubr.f32.gmra.mxu0 %v68
  %v155 = vpop.f32.mrf.mxu0
  %v156 = vadd.f32 %v55, %v155
  %v157 = vpop.f32.mrf.mxu0
  %158 = vdwg.mxu0
  %v159 = vtanh.pop %v141
  %v160 = vtanh.pop %v146
  %v161 = vtanh.pop %v151
  %v162 = vtanh.pop %v156
  %v163 = vmul.f32 %v159, %v159
  %v164 = vmul.f32 %v160, %v160
  %v165 = vmul.f32 %v161, %v161
  %v166 = vmul.f32 %v162, %v162
  %v167 = vld [vmem:[%s3] sm:$0xff]
  %v168 = vld [vmem:[%s3 + $0x8] sm:$0x1]
  %v169 = vld [vmem:[%s4] sm:$0xff]
  %v170 = vld [vmem:[%s4 + $0x8] sm:$0x1]
  %172 = vset.pattern.permute.xlu0 0
  %173 = vperm.xlu0 %172, %v169
  %v174 = vpop.permute.xlu0 %173
  %177 = vset.pattern.permute.xlu0 0
  %178 = vperm.xlu0 %177, %v170
  %v179 = vpop.permute.xlu0 %178
  %vm181 = vcmask 523264
  %v183 = vsel %vm181, %v167, 0
  %v186 = vsel %vm181, %v168, 0
  %188 = vmatprep.subr.mxu0 0.0
  %189 = vmatpush1.msra.mxu0 0.0
  %190 = vmatprep.subr.mxu0 0.0
  %191 = vmatpush1.msra.mxu0 0.0
  %192 = vmatprep.subr.mxu0 0.0
  %193 = vmatpush1.msra.mxu0 0.0
  %194 = vmatprep.subr.mxu0 0.0
  %195 = vmatpush1.msra.mxu0 0.0
  %196 = vmatprep.subr.mxu0 0.0
  %197 = vmatpush1.msra.mxu0 0.0
  %198 = vmatprep.subr.mxu0 0.0
  %199 = vmatpush1.msra.mxu0 0.0
  %200 = vmatprep.subr.mxu0 0.0
  %201 = vmatpush1.msra.mxu0 0.0
  %202 = vmatprep.subr.mxu0 0.0
  %203 = vmatpush1.msra.mxu0 0.0
  %204 = vmatprep.subr.mxu0 0.0
  %205 = vmatpush1.msra.mxu0 %v166
  %206 = vmatprep.subr.mxu0 0.0
  %207 = vmatpush1.msra.mxu0 %v165
  %208 = vmatprep.subr.mxu0 0.0
  %209 = vmatpush1.msra.mxu0 %v164
  %210 = vmatprep.subr.mxu0 0.0
  %211 = vmatpush1.msra.mxu0 %v163
  %212 = vmatprep.subr.mxu0 0.0
  %213 = vmatpush1.msra.mxu0 %v162
  %214 = vmatprep.subr.mxu0 0.0
  %215 = vmatpush1.msra.mxu0 %v161
  %216 = vmatprep.subr.mxu0 0.0
  %217 = vmatpush1.msra.mxu0 %v160
  %218 = vmatprep.subr.mxu0 0.0
  %219 = vmatpush1.msra.mxu0 %v159
  %220 = vmatprep.subr.mxu0 0.0
  %221 = vmatpush2.msra.mxu0 0.0
  %222 = vmatprep.subr.mxu0 0.0
  %223 = vmatpush2.msra.mxu0 0.0
  %224 = vmatprep.subr.mxu0 0.0
  %225 = vmatpush2.msra.mxu0 0.0
  %226 = vmatprep.subr.mxu0 0.0
  %227 = vmatpush2.msra.mxu0 0.0
  %228 = vmatprep.subr.mxu0 0.0
  %229 = vmatpush2.msra.mxu0 0.0
  %230 = vmatprep.subr.mxu0 0.0
  %231 = vmatpush2.msra.mxu0 0.0
  %232 = vmatprep.subr.mxu0 0.0
  %233 = vmatpush2.msra.mxu0 0.0
  %234 = vmatprep.subr.mxu0 0.0
  %235 = vmatpush2.msra.mxu0 0.0
  %236 = vmatprep.subr.mxu0 0.0
  %237 = vmatpush2.msra.mxu0 0.0
  %238 = vmatprep.subr.mxu0 0.0
  %239 = vmatpush2.msra.mxu0 0.0
  %240 = vmatprep.subr.mxu0 0.0
  %241 = vmatpush2.msra.mxu0 0.0
  %242 = vmatprep.subr.mxu0 0.0
  %243 = vmatpush2.msra.mxu0 0.0
  %244 = vmatprep.subr.mxu0 0.0
  %245 = vmatpush2.msra.mxu0 0.0
  %246 = vmatprep.subr.mxu0 0.0
  %247 = vmatpush2.msra.mxu0 0.0
  %248 = vmatprep.subr.mxu0 0.0
  %249 = vmatpush2.msra.mxu0 0.0
  %250 = vmatprep.subr.mxu0 0.0
  %251 = vmatpush2.msra.mxu0 0.0
  %252 = vmatprep.mubr.f32.mxu0 0.0
  %253 = vmatmul.mubr.f32.gmra.mxu0 %v183
  %v254 = vpop.f32.mrf.mxu0
  %v255 = vadd.f32 %v174, %v254
  %v256 = vpop.f32.mrf.mxu0
  %257 = vmatprep.mubr.f32.mxu0 0.0
  %258 = vmatmul.mubr.f32.gmra.mxu0 %v186
  %v259 = vpop.f32.mrf.mxu0
  %v260 = vadd.f32 %v179, %v259
  %v261 = vpop.f32.mrf.mxu0
  %262 = vdwg.mxu0
  %v263 = vmul.f32 %v20, 0.0
  %v264 = vmul.f32 %v21, 0.0
  %v265 = vadd.f32 %v255, %v263
  %v266 = vadd.f32 %v260, %v264
  %267 = vst [vmem:[%s5] sm:$0xff] %v265
  %268 = vst [vmem:[%s5 + $0x8] sm:$0x1] %v266
  // Predicated region
  $region22: #{old_cnf_forward.1} parent=0 // pred_check
    _
  $region23: #{old_cnf_forward.1} parent=0 // pred_check_branch
    %270 = sbr.rel (0) target = $region25
  $region24: #{old_cnf_forward.1} parent=0 // pred_region
    _
  $region25: #{old_cnf_forward.1} parent=0 // pred_fallthru
    _
  // Predicated region
  $region26: #{old_cnf_forward.1} parent=0 // pred_check
    _
  $region27: #{old_cnf_forward.1} parent=0 // pred_check_branch
    %272 = sbr.rel (0) target = $region29
  $region28: #{old_cnf_forward.1} parent=0 // pred_region
    _
  $region29: #{old_cnf_forward.1} parent=0 // pred_fallthru
    _

</llo_original>
